<compile_context>
chip_gen: v6e
topology: v6e:2x2x1
jax: 0.10.0
libtpu: 0.0.40
codegen_flags: <defaults>
</compile_context>

<pallas_src>
import numpy as np
import jax
import jax.numpy as jnp
from jax import lax
from jax.experimental import pallas as pl
from jax.experimental.pallas import tpu as pltpu

EPS = 1e-5          # PyTorch InstanceNorm3d default eps (affine=False default)
TD_CONV = 2         # output D-planes per conv grid step (halo overhead (TD+2)/TD);
                    # raise to 4-8 on v5e/v6e (128 MiB VMEM) at production sizes
TD_NORM = 8         # D-planes per normalize grid step (pure elementwise)
VMEM_FLOOR = 32 * 1024 * 1024
VMEM_CEIL = 100 * 1024 * 1024


def _pick_td(d, cap):
    for td in range(min(d, cap), 0, -1):
        if d % td == 0:
            return td
    return 1


def _vmem_limit(est_bytes):
    return int(min(VMEM_CEIL, max(VMEM_FLOOR, 2 * est_bytes)))


# ----------------------------------------------------------------------------
# pltpu.roll convention probe (runs once, eagerly)
# ----------------------------------------------------------------------------
_ROLL_JNP = None


def _roll_matches_jnp():
    """True iff pltpu.roll matches jnp.roll (result[i] = x[(i - shift) % n])."""
    global _ROLL_JNP
    if _ROLL_JNP is None:
        def k(x_ref, o_ref):
            o_ref[...] = pltpu.roll(x_ref[...], 1, 0)
        x = jnp.broadcast_to(jnp.arange(8, dtype=jnp.float32)[:, None], (8, 128))
        r = pl.pallas_call(k, out_shape=jax.ShapeDtypeStruct((8, 128), jnp.float32))(x)
        _ROLL_JNP = bool(jax.device_get(r)[0, 0] == 7.0)
    return _ROLL_JNP


# ----------------------------------------------------------------------------
# Conv3d (k in {1,3}, pad=(k-1)//2) + per-plane InstanceNorm partial statistics
# ----------------------------------------------------------------------------
def _make_conv_kernel(*, kd, TD, NB, H, W, Cin, Cout, has_bias, want_stats, roll_jnp):
    """One grid step computes TD consecutive output D-planes.

    Refs: x_main (TD,HW,Cin) [, x_prev (1,HW,Cin), x_next (1,HW,Cin)],
          w (kd**3,Cin,Cout) bf16 [, bias (1,Cout) f32],
          out (TD,HW,Cout) bf16 [, stats (TD,2,Cout) f32].
    stats row 0 = per-plane channel sum, row 1 = per-plane sum((y - plane_mean)^2).
    """
    HW = H * W
    inv_hw = 1.0 / float(HW)

    def shift_rows(v, delta):
        # result[i, :] = v[(i + delta) % HW, :]   (static delta)
        if delta == 0:
            return v
        if HW % 8 == 0:
            sh = (-delta) % HW if roll_jnp else delta % HW
            return pltpu.roll(v, sh, 0)
        # tiny deep-stage planes (HW not sublane aligned): safe jnp.roll fallback
        return jnp.roll(v, -delta, axis=0)

    def kernel(*refs):
        i = 0
        x_main = refs[i]; i += 1
        if kd == 3:
            x_prev, x_next = refs[i], refs[i + 1]; i += 2
        w_ref = refs[i]; i += 1
        b_ref = None
        if has_bias:
            b_ref = refs[i]; i += 1
        o_ref = refs[i]; i += 1
        s_ref = refs[i] if want_stats else None

        if kd == 3:
            blk = pl.program_id(0)
            flat = lax.broadcasted_iota(jnp.int32, (HW, 1), 0)
            hh = flat // W
            ww = flat % W
            valid_prev = blk > 0           # plane before the volume is zero padding
            valid_next = blk < NB - 1      # plane after the volume is zero padding

        for t in range(TD):
            acc = jnp.zeros((HW, Cout), jnp.float32)
            if has_bias:
                acc = acc + b_ref[...]
            tap = 0
            for kz in range(kd):
                if kd == 3:
                    q = t + kz - 1
                    if q < 0:
                        plane, kz_ok = x_prev[0], valid_prev
                    elif q >= TD:
                        plane, kz_ok = x_next[0], valid_next
                    else:
                        plane, kz_ok = x_main[q], None
                else:
                    plane, kz_ok = x_main[t], None
                for ky in range(kd):
                    for kx in range(kd):
                        wt = w_ref[tap]
                        tap += 1
                        if Cin == 1:
                            # pre-block (Cin=1): VPU broadcast-multiply, no MXU
                            yt = plane.astype(jnp.float32) * wt.astype(jnp.float32)
                        else:
                            yt = jnp.dot(plane, wt,
                                         preferred_element_type=jnp.float32)
                        if kd == 3:
                            # shift the tap result so it lands at (h, w) instead of
                            # (h+ky-1, w+kx-1); XLU roll co-issues with the MXU.
                            yt = shift_rows(yt, (ky - 1) * W + (kx - 1))
                            conds = []
                            if ky == 0:
                                conds.append(hh >= 1)
                            if ky == 2:
                                conds.append(hh <= H - 2)
                            if kx == 0:
                                conds.append(ww >= 1)
                            if kx == 2:
                                conds.append(ww <= W - 2)
                            mask = None
                            for c in conds:
                                mask = c if mask is None else jnp.logical_and(mask, c)
                            if kz_ok is not None:
                                mask = kz_ok if mask is None else jnp.logical_and(mask, kz_ok)
                            if mask is not None:
                                yt = jnp.where(mask, yt, 0.0)
                        acc = acc + yt
            o_ref[t] = acc.astype(o_ref.dtype)
            if want_stats:
                psum = jnp.sum(acc, axis=0, keepdims=True)          # (1, Cout)
                dev = acc - psum * inv_hw
                pssd = jnp.sum(dev * dev, axis=0, keepdims=True)    # (1, Cout)
                s_ref[t] = jnp.concatenate([psum, pssd], axis=0)

    return kernel


def conv3d_raw(x, w, bias, *, dims, want_stats):
    """Conv3d(k in {1,3}, pad, stride=1) on (D, H*W, Cin) bf16 -> raw bf16 output
    (pre-norm) and optional per-plane InstanceNorm partial stats (D, 2, Cout)."""
    D, H, W = dims
    HW = H * W
    Cin, Cout = int(w.shape[1]), int(w.shape[2])
    kd = 3 if w.shape[0] == 27 else 1
    TD = _pick_td(D, TD_CONV)
    NB = D // TD

    inputs = [x]
    in_specs = [pl.BlockSpec((TD, HW, Cin), lambda b: (b, 0, 0))]
    if kd == 3:
        # Halo planes: one before / one after the TD-plane block, fetched with a
        # clamped index map and zeroed in-kernel at the volume boundary.  No
        # HBM-materialised jnp.pad, input traffic = (TD+2)/TD x.
        inputs += [x, x]
        in_specs += [
            pl.BlockSpec((1, HW, Cin), lambda b: (jnp.maximum(b * TD - 1, 0), 0, 0)),
            pl.BlockSpec((1, HW, Cin), lambda b: (jnp.minimum(b * TD + TD, D - 1), 0, 0)),
        ]
    inputs.append(w)
    # Constant index map -> the resident weights are only DMA'd once.
    # TODO(synk): pipeline_mode=pl.Buffered(1) would also drop the second buffer.
    in_specs.append(pl.BlockSpec(w.shape, lambda b: (0, 0, 0)))
    if bias is not None:
        inputs.append(bias)
        in_specs.append(pl.BlockSpec(bias.shape, lambda b: (0, 0)))

    out_shape = [jax.ShapeDtypeStruct((D, HW, Cout), jnp.bfloat16)]
    out_specs = [pl.BlockSpec((TD, HW, Cout), lambda b: (b, 0, 0))]
    if want_stats:
        out_shape.append(jax.ShapeDtypeStruct((D, 2, Cout), jnp.float32))
        out_specs.append(pl.BlockSpec((TD, 2, Cout), lambda b: (b, 0, 0)))

    kernel = _make_conv_kernel(kd=kd, TD=TD, NB=NB, H=H, W=W, Cin=Cin, Cout=Cout,
                               has_bias=bias is not None, want_stats=want_stats,
                               roll_jnp=_roll_matches_jnp())

    est = 2 * ((TD + 2) * HW * Cin * 2 + TD * HW * Cout * 2
               + int(w.size) * 2 + TD * 2 * Cout * 4) + 6 * HW * Cout * 4
    # TODO(synk): at production H,W add an H-axis grid (row tiles) so the blocks
    # stay inside v7x's 64 MiB VMEM; not needed at these toy sizes.
    res = pl.pallas_call(
        kernel,
        out_shape=tuple(out_shape),
        grid=(NB,),
        in_specs=in_specs,
        out_specs=tuple(out_specs),
        compiler_params=pltpu.CompilerParams(
            dimension_semantics=("parallel",),   # independent D-blocks (megacore/2-TC)
            vmem_limit_bytes=_vmem_limit(est)),
    )(*inputs)
    if want_stats:
        return res[0], res[1]
    return res[0]


# ----------------------------------------------------------------------------
# InstanceNorm3d(affine=False) apply (+residual) (+ReLU)  — pure elementwise
# ----------------------------------------------------------------------------
def _make_norm_kernel(has_res, relu):
    def kernel(*refs):
        i = 0
        y_ref = refs[i]; i += 1
        ss_ref = refs[i]; i += 1
        r_ref = None
        if has_res:
            r_ref = refs[i]; i += 1
        o_ref = refs[i]
        y = y_ref[...].astype(jnp.float32)
        out = y * ss_ref[0:1, :] + ss_ref[1:2, :]
        if has_res:
            out = out + r_ref[...].astype(jnp.float32)
        if relu:
            out = jnp.maximum(out, 0.0)
        o_ref[...] = out.astype(o_ref.dtype)
    return kernel


def instance_norm_apply(y, stats, *, dims, relu, residual=None):
    D, H, W = dims
    HW = H * W
    C = int(y.shape[-1])
    n_p = float(HW)
    n_tot = float(D * HW)
    # Chan combination of per-plane shifted statistics (numerically robust).
    psum = stats[:, 0, :]                                     # (D, C)
    pssd = stats[:, 1, :]
    mean = jnp.sum(psum, axis=0) / n_tot                      # (C,)
    pmean = psum / n_p
    m2 = jnp.sum(pssd, axis=0) + n_p * jnp.sum((pmean - mean[None, :]) ** 2, axis=0)
    rstd = lax.rsqrt(m2 / n_tot + EPS)
    ss = jnp.stack([rstd, -mean * rstd], axis=0).astype(jnp.float32)   # (2, C)

    TB = _pick_td(D, TD_NORM)
    inputs = [y, ss]
    in_specs = [pl.BlockSpec((TB, HW, C), lambda b: (b, 0, 0)),
                pl.BlockSpec((2, C), lambda b: (0, 0))]
    if residual is not None:
        inputs.append(residual)
        in_specs.append(pl.BlockSpec((TB, HW, C), lambda b: (b, 0, 0)))
    est = 2 * (len(inputs) + 1) * TB * HW * C * 2 + 2 * TB * HW * C * 4
    return pl.pallas_call(
        _make_norm_kernel(residual is not None, relu),
        out_shape=jax.ShapeDtypeStruct((D, HW, C), jnp.bfloat16),
        grid=(D // TB,),
        in_specs=in_specs,
        out_specs=pl.BlockSpec((TB, HW, C), lambda b: (b, 0, 0)),
        compiler_params=pltpu.CompilerParams(
            dimension_semantics=("parallel",), vmem_limit_bytes=_vmem_limit(est)),
    )(*inputs)


def conv_in_act(p, x, dims, *, norm, relu, residual=None):
    """Conv3d (+InstanceNorm3d affine=False) (+residual) (+ReLU)."""
    if norm:
        # A conv bias in front of InstanceNorm(affine=False) is an exact no-op.
        y, stats = conv3d_raw(x, p['w'], None, dims=dims, want_stats=True)
        return instance_norm_apply(y, stats, dims=dims, relu=relu, residual=residual)
    return conv3d_raw(x, p['w'], p.get('b'), dims=dims, want_stats=False)


# ----------------------------------------------------------------------------
# Pool / upsample glue (pure data movement, left to XLA)
# ----------------------------------------------------------------------------
def maxpool_2x2x2(x, dims):
    D, H, W = dims
    C = x.shape[-1]
    t = x.reshape(D // 2, 2, H // 2, 2, W // 2, 2, C).max(axis=(1, 3, 5))
    return t.reshape(D // 2, (H // 2) * (W // 2), C), (D // 2, H // 2, W // 2)


def _linear_upsample_axis(x, axis, out_size):
    """PyTorch trilinear (align_corners=False) interpolation along one axis."""
    in_size = x.shape[axis]
    scale = in_size / out_size
    dst = jnp.arange(out_size, dtype=jnp.float32)
    src = jnp.maximum((dst + 0.5) * scale - 0.5, 0.0)
    i0 = jnp.clip(jnp.floor(src).astype(jnp.int32), 0, in_size - 1)
    i1 = jnp.clip(i0 + 1, 0, in_size - 1)
    w1 = src - i0.astype(jnp.float32)
    w0 = 1.0 - w1
    bshape = [1] * x.ndim
    bshape[axis] = out_size
    x0 = jnp.take(x, i0, axis=axis).astype(jnp.float32)
    x1 = jnp.take(x, i1, axis=axis).astype(jnp.float32)
    return (x0 * w0.reshape(bshape) + x1 * w1.reshape(bshape)).astype(jnp.bfloat16)


def upsample_trilinear_x8(x, dims):
    # TODO(synk): fold the x8 trilinear lerp into the dsv conv kernel (compute the
    # fine tile from the VMEM-resident coarse block) so the full-resolution tensor
    # is never materialised in HBM; kept here as a bf16 XLA gather/lerp.
    D, H, W = dims
    C = x.shape[-1]
    t = x.reshape(D, H, W, C)
    for axis in range(3):
        t = _linear_upsample_axis(t, axis, t.shape[axis] * 8)
    return t.reshape(D * 8, (H * 8) * (W * 8), C), (D * 8, H * 8, W * 8)


# ----------------------------------------------------------------------------
# FeatureNet / ResBlock3d forward
# ----------------------------------------------------------------------------
def resblock_forward(p, x, dims):
    if 'shortcut' in p:
        residual = conv_in_act(p['shortcut'], x, dims, norm=True, relu=False)
    else:
        residual = x
    out = conv_in_act(p['conv1'], x, dims, norm=True, relu=True)
    out = conv_in_act(p['conv2'], out, dims, norm=True, relu=True, residual=residual)
    return out


def featurenet_forward(p, x, dims):
    d0 = dims
    out = conv_in_act(p['pre1'], x, d0, norm=True, relu=True)
    out = conv_in_act(p['pre2'], out, d0, norm=True, relu=True)

    out_pool, d1 = maxpool_2x2x2(out, d0)
    out1 = resblock_forward(p['forw1_0'], out_pool, d1)
    out1 = resblock_forward(p['forw1_1'], out1, d1)

    out1_pool, d2 = maxpool_2x2x2(out1, d1)
    out2 = resblock_forward(p['forw2_0'], out1_pool, d2)
    out2 = resblock_forward(p['forw2_1'], out2, d2)

    out2_pool, d3 = maxpool_2x2x2(out2, d2)
    out3 = resblock_forward(p['forw3_0'], out2_pool, d3)
    out3 = resblock_forward(p['forw3_1'], out3, d3)
    out3 = resblock_forward(p['forw3_2'], out3, d3)

    # dsv = Upsample(scale=8, trilinear) -> Conv3d(64, num_classes, k=3, pad=1)
    up, du = upsample_trilinear_x8(out3, d3)
    # TODO(synk): pack taps to K=256 for the v6e/v7x MXU on the 64-channel stages.
    dsv = conv_in_act(p['dsv'], up, du, norm=False, relu=False)
    # (forw4 / maxpool4 are defined in the PyTorch __init__ but never used.)

    def unflat(a, d):
        return a.reshape(d[0], d[1], d[2], a.shape[-1])

    return {'d1': unflat(out, d0), 'd2': unflat(out1, d1),
            'd3': unflat(out2, d2), 'd4': unflat(out3, d3),
            'dsv': unflat(dsv, du)}


# ----------------------------------------------------------------------------
# LGCANet_V3 forward
# ----------------------------------------------------------------------------
def lgca_net_v3_forward(params, data, num_classes):
    volume = data['volume']          # (1, 1, D, H, W)  NCDHW
    slice2d = data['slice']          # (B, C, H, W)     NCHW

    D, H, W = volume.shape[2:]
    x = volume[0, 0].reshape(D, H * W, 1).astype(jnp.bfloat16)

    feats = featurenet_forward(params['context_net'], x, (D, H, W))

    B, _, Hs, Ws = slice2d.shape
    p4 = feats['d4'].astype(jnp.float32)
    # AdaptiveAvgPool3d((1,1,1)) -> view -> expand(B,-1) -> expand(-1,-1,H,W)
    glob = jnp.mean(p4, axis=(0, 1, 2))                       # (64,)
    glob_feat = jnp.broadcast_to(glob.reshape(1, -1, 1, 1),
                                 (B, glob.shape[0], Hs, Ws))

    def to_ncdhw(t):
        return jnp.transpose(t.astype(jnp.float32), (3, 0, 1, 2))[None]

    # TODO(synk): cfg['net_UNet'] (the 2-D UNet consuming (slice, features_3D)) is
    # resolved via getattr and its class is not provided, so the 'seg_2d' branch
    # cannot be implemented; the 3-D context features, dsv and glob_feat are
    # returned (data_parallel / .expand over device_count are single-device identities).
    return {
        'dsv': to_ncdhw(feats['dsv']),
        'd1': to_ncdhw(feats['d1']),
        'd2': to_ncdhw(feats['d2']),
        'd3': to_ncdhw(feats['d3']),
        'd4': to_ncdhw(feats['d4']),
        'glob_feat': glob_feat,
    }


# ----------------------------------------------------------------------------
# Deterministic parameter init (synthetic; no checkpoint loading)
# ----------------------------------------------------------------------------
def init_params(key, num_classes):
    keys = iter(jax.random.split(key, 64))

    def pack_w(k, kd, cin, cout):
        # To load real PyTorch weights (Cout, Cin, kD, kH, kW):
        #   w.transpose(2, 3, 4, 1, 0).reshape(kd**3, cin, cout)
        fan_in = kd ** 3 * cin
        w = jax.random.normal(k, (kd ** 3, cin, cout), jnp.float32) / np.sqrt(fan_in)
        return w.astype(jnp.bfloat16)

    def conv3(cin, cout, bias=False):
        p = {'w': pack_w(next(keys), 3, cin, cout)}
        if bias:
            # bias kept only where no InstanceNorm follows (IN makes it a no-op)
            b = 0.01 * jax.random.normal(next(keys), (cout,), jnp.float32)
            p['b'] = b.reshape(1, cout)
        return p

    def conv1(cin, cout):
        return {'w': pack_w(next(keys), 1, cin, cout)}

    def resblock(cin, cout):
        p = {'conv1': conv3(cin, cout), 'conv2': conv3(cout, cout)}
        if cin != cout:
            p['shortcut'] = conv1(cin, cout)
        return p

    ctx = {
        'pre1': conv3(1, 24), 'pre2': conv3(24, 24),
        'forw1_0': resblock(24, 32), 'forw1_1': resblock(32, 32),
        'forw2_0': resblock(32, 64), 'forw2_1': resblock(64, 64),
        'forw3_0': resblock(64, 64), 'forw3_1': resblock(64, 64),
        'forw3_2': resblock(64, 64),
        'dsv': conv3(64, num_classes, bias=True),
        # forw4 / maxpool4 are never used in forward -> not initialised.
    }
    return {'context_net': ctx}


# ----------------------------------------------------------------------------
# Pure-JAX reference for the in-script self-check
# ----------------------------------------------------------------------------
def _reference_conv_in_relu(x, w, dims):
    """f32 reference: Conv3d(k=3, pad=1) -> InstanceNorm3d(affine=False) -> ReLU."""
    D, H, W = dims
    cin, cout = int(w.shape[1]), int(w.shape[2])
    xf = x.astype(jnp.float32).reshape(D, H, W, cin)
    xin = jnp.transpose(xf, (3, 0, 1, 2))[None]                      # (1,Cin,D,H,W)
    wf = w.astype(jnp.float32).reshape(3, 3, 3, cin, cout)
    wf = jnp.transpose(wf, (4, 3, 0, 1, 2))                          # (Cout,Cin,3,3,3)
    y = lax.conv_general_dilated(xin, wf, (1, 1, 1), ((1, 1), (1, 1), (1, 1)),
                                 dimension_numbers=('NCDHW', 'OIDHW', 'NCDHW'),
                                 precision=lax.Precision.HIGHEST)
    mean = y.mean(axis=(2, 3, 4), keepdims=True)
    var = y.var(axis=(2, 3, 4), keepdims=True)
    y = jnp.maximum((y - mean) * lax.rsqrt(var + EPS), 0.0)
    return jnp.transpose(y[0], (1, 2, 3, 0)).reshape(D, H * W, cout)


# ----------------------------------------------------------------------------
if __name__ == "__main__":
    _roll_matches_jnp()   # probe the roll convention once, eagerly

    # --- kernel vs. pure-JAX reference self-check (k=3 conv + IN + ReLU) -----
    kc1, kc2 = jax.random.split(jax.random.PRNGKey(1))
    Dt, Ht, Wt, Ci, Co = 4, 8, 8, 24, 32
    xt = jax.random.normal(kc1, (Dt, Ht * Wt, Ci), jnp.float32).astype(jnp.bfloat16)
    wt = (jax.random.normal(kc2, (27, Ci, Co), jnp.float32)
          / np.sqrt(27 * Ci)).astype(jnp.bfloat16)
    got = conv_in_act({'w': wt}, xt, (Dt, Ht, Wt), norm=True, relu=True)
    got = np.asarray(jax.device_get(got.astype(jnp.float32)))
    want = np.asarray(jax.device_get(_reference_conv_in_relu(xt, wt, (Dt, Ht, Wt))))
    np.testing.assert_allclose(got, want, atol=0.1, rtol=0.1)

    # --- full LGCANet_V3 (context branch) forward -----------------------------
    cfg = {'roi_names': ['organ_a', 'organ_b'], 'net_UNet': 'UNet'}
    num_classes = len(cfg['roi_names'])
    kp, kv, ks = jax.random.split(jax.random.PRNGKey(0), 3)
    params = init_params(kp, num_classes)

    D, H, W = 8, 16, 16
    B = 2
    data = {
        'volume': jax.random.normal(kv, (1, 1, D, H, W), jnp.float32),
        'slice': jax.random.normal(ks, (B, 1, H, W), jnp.float32),
        'slice_num': jnp.array([3, 4], jnp.int32),
        'slice_weight': jnp.ones((B,), jnp.float32),
    }

    fwd = jax.jit(lambda prm, dat: lgca_net_v3_forward(prm, dat, num_classes))
    out = fwd(params, data)
    out = jax.tree_util.tree_map(jax.block_until_ready, out)

    assert out['dsv'].shape == (1, num_classes, D, H, W)
    assert out['d1'].shape == (1, 24, D, H, W)
    assert out['d2'].shape == (1, 32, D // 2, H // 2, W // 2)
    assert out['d3'].shape == (1, 64, D // 4, H // 4, W // 4)
    assert out['d4'].shape == (1, 64, D // 8, H // 8, W // 8)
    assert out['glob_feat'].shape == (B, 64, H, W)
    assert all(bool(jnp.isfinite(v).all()) for v in out.values())

    print("KERNEL_OK")
</pallas_src>

<mosaic_0001>
module attributes {stable_mosaic.version = 11 : i64} {
  func.func @k(%arg0: memref<8x128xf32, #tpu.memory_space<vmem>>, %arg1: memref<8x128xf32, #tpu.memory_space<vmem>>) attributes {dimension_semantics = [], scalar_prefetch = 0 : i64, scratch_operands = 0 : i64, tpu.core_type = #tpu.core_type<tc>} {
    %c0 = arith.constant 0 : index
    %c0_0 = arith.constant 0 : index
    %0 = vector.load %arg0[%c0, %c0_0] : memref<8x128xf32, #tpu.memory_space<vmem>>, vector<8x128xf32>
    %c1_i32 = arith.constant 1 : i32
    %1 = tpu.dynamic_rotate %0 by %c1_i32 dim 0 : vector<8x128xf32>, i32 -> vector<8x128xf32>
    %c0_1 = arith.constant 0 : index
    %c0_2 = arith.constant 0 : index
    %2 = vector.load %arg1[%c0_1, %c0_2] : memref<8x128xf32, #tpu.memory_space<vmem>>, vector<8x128xf32>
    tpu.vector_store %arg1[%c0_1, %c0_2], %1 {strides = array<i32>} : memref<8x128xf32, #tpu.memory_space<vmem>>, vector<8x128xf32>,
    return
  }
}

</mosaic_0001>

<llo_original>
// kernel: tpu_custom_call.1
$region0: #{tpu_custom_call.1}
  #allocation0 [shape = 'u32[]', space=smem, size = 0x4, offset = 0x4, fixed_abs, tag = 'smem constant byte address 0x4 - core index']
  #allocation1 [shape = 'u32[144,128]{1,0:T(1,128)}', space=vmem, size = 0x12000, scoped, tag = 'internal scratch']
  %s0 = inlined_call_operand.hbm [shape: f32[8,128], index: 0, kind: input, shape index: {}]
  %s1 = inlined_call_operand.hbm [shape: f32[8,128], index: 1, kind: output, shape index: {}]
  %s2 = sld [smem:[#allocation0]]
  $region18: #{tpu_custom_call.1} parent=0
    _
  %s4 = ssub.s32 1, %s2
  %s5 = scalar_select 0, %s4, %s2
  $region1: #{tpu_custom_call.1} parent=0
    #allocation2 [shape = 'u8[4096]{0}', space=vmem, size = 0x1000, scoped, tag = 'input window, operand 0, single buffered']
    #allocation3 [shape = 's32[1]{0}', space=sflag, size = 0x4, scoped, tag = 'scoped memory for tpu_custom_call.1']
    #allocation4 [shape = 's32[1]{0}', space=sflag, size = 0x4, scoped, tag = 'scoped memory for tpu_custom_call.1']
    #allocation5 [shape = 'u8[4096]{0}', space=vmem, size = 0x1000, scoped, tag = 'output window, operand 0, single buffered']
    %6 = vsyncpa [#allocation3], 0
    %7 = vsyncpa [#allocation4], 0
    // Predicated region
    $region2: #{tpu_custom_call.1} parent=1 // pred_check
      _
    $region3: #{tpu_custom_call.1} parent=1 // pred_check_branch
      %9 = sbr.rel (0) target = $region5
    $region4: #{tpu_custom_call.1} parent=1 // pred_region
      %s11 = ssub.s32 128, 128
      %12 = vsyncadd [#allocation3], %s11
      %s14 = sshll.u32 [#allocation2], 4
      %s15 = int_to_ptr.vmem [resolvable:$true] %s14
      %17 = dma.hbm_to_vmem [thread:$0]  %s0, 128, %s15, [#allocation3]
    $region5: #{tpu_custom_call.1} parent=1 // pred_fallthru
      _
    // Predicated region
    $region6: #{tpu_custom_call.1} parent=1 // pred_check
      _
    $region7: #{tpu_custom_call.1} parent=1 // pred_check_branch
      %19 = sbr.rel (0) target = $region9
    $region8: #{tpu_custom_call.1} parent=1 // pred_region
      %20 = dma.done [#allocation3], 128
    $region9: #{tpu_custom_call.1} parent=1 // pred_fallthru
      _
    %v21 = vld [vmem:[#allocation2] sm:$0xff]
    %v22 = vrot.slane %v21, 7
    %23 = vst [vmem:[#allocation5] sm:$0xff] %v22
    // Predicated region
    $region10: #{tpu_custom_call.1} parent=1 // pred_check
      _
    $region11: #{tpu_custom_call.1} parent=1 // pred_check_branch
      %25 = sbr.rel (0) target = $region13
    $region12: #{tpu_custom_call.1} parent=1 // pred_region
      %s27 = ssub.s32 128, 128
      %28 = vsyncadd [#allocation4], %s27
      %s30 = sshll.u32 [#allocation5], 4
      %s31 = int_to_ptr.vmem [resolvable:$true] %s30
      %33 = dma.vmem_to_hbm [thread:$0]  %s31, 128, %s1, [#allocation4]
    $region13: #{tpu_custom_call.1} parent=1 // pred_fallthru
      _
    // Predicated region
    $region14: #{tpu_custom_call.1} parent=1 // pred_check
      _
    $region15: #{tpu_custom_call.1} parent=1 // pred_check_branch
      %35 = sbr.rel (0) target = $region17
    $region16: #{tpu_custom_call.1} parent=1 // pred_region
      %36 = dma.done [#allocation4], 128
    $region17: #{tpu_custom_call.1} parent=1 // pred_fallthru
      _
    %37 = vsyncpa [#allocation3], 1
    %38 = vsyncpa [#allocation4], 1

</llo_original>
